<compile_context>
chip_gen: v7x
topology: tpu7x:2x2x1
jax: 0.10.0
libtpu: 0.0.40
codegen_flags: <defaults>
</compile_context>

<pallas_src>
import jax
import jax.numpy as jnp
from jax.experimental import pallas as pl
from jax.experimental.pallas import tpu as pltpu

EPS = 1e-5
BLOCK_M = 1024  # lanes per grid step when the fused N*H_out axis gets large


def fused_kernel(x_ref, wt_ref, b_ref, o_ref):
    # x_ref : (C_in, W, Mb)   VMEM  cropped input, image rows on the lane axis
    # wt_ref: (C_out, C_in)   SMEM  transposed ConvTranspose2d 1x1 weight
    # b_ref : (C_out,)        SMEM  conv bias
    # o_ref : (C_out, W, Mb)  VMEM
    c_in = x_ref.shape[0]
    c_out = o_ref.shape[0]

    # Hoist the per-input-channel slabs (each a lane-dense (W, Mb) slab).
    xs = [x_ref[ci] for ci in range(c_in)]

    for co in range(c_out):                      # static unroll, C_out = 4
        # 1x1 transposed conv == per-channel scalar multiply-accumulate on the VPU.
        # Balanced-tree reduction: depth 3 instead of a 7-deep dependent add chain
        # (no f32 FMA on v5e/v6e, mul and add are separate VALU ops).
        prods = [xs[ci] * wt_ref[co, ci] for ci in range(c_in)]
        while len(prods) > 1:
            nxt = [prods[i] + prods[i + 1] for i in range(0, len(prods) - 1, 2)]
            if len(prods) % 2:
                nxt.append(prods[-1])
            prods = nxt
        v1 = prods[0] + b_ref[co]                                  # (W, Mb)

        # LayerNorm over the width axis (sublanes -> XLU reduce), biased variance,
        # rsqrt on the EUP. Default affine (gamma=1, beta=0) specialized out;
        # residual add fused into the store.
        mean = jnp.mean(v1, axis=0, keepdims=True)                 # (1, Mb)
        cent = v1 - mean
        var = jnp.mean(cent * cent, axis=0, keepdims=True)
        inv = jax.lax.rsqrt(var + EPS)
        o_ref[co] = (cent * inv + v1).astype(o_ref.dtype)


def _run_fused(xr, wt, b):
    """xr: (C_in, W_out, M) f32; wt: (C_out, C_in); b: (C_out,)."""
    C_in, W_out, M = xr.shape
    C_out = wt.shape[0]
    out_shape = jax.ShapeDtypeStruct((C_out, W_out, M), jnp.float32)

    if M <= BLOCK_M or M % BLOCK_M != 0:
        # Whole problem in one invocation; a serial grid would be pure per-step
        # overhead at this size. allow_input_fusion lets XLA fuse the crop/transpose
        # producer of xr into the pallas_call's input instead of a separate fusion.
        return pl.pallas_call(
            fused_kernel,
            out_shape=out_shape,
            in_specs=[
                pl.BlockSpec(memory_space=pltpu.MemorySpace.VMEM),   # xr
                pl.BlockSpec(memory_space=pltpu.MemorySpace.SMEM),   # weight (scalars)
                pl.BlockSpec(memory_space=pltpu.MemorySpace.SMEM),   # bias (scalars)
            ],
            out_specs=pl.BlockSpec(memory_space=pltpu.MemorySpace.VMEM),
            compiler_params=pltpu.CompilerParams(
                allow_input_fusion=[True, False, False]),
        )(xr, wt, b)

    # Large-N path: 1-D parallel grid over the fused lane axis M. Blocks are
    # multiples of 128 lanes, per-block VMEM (~384*BLOCK_M bytes, double buffered)
    # stays far under the 32 MiB default scoped limit, and "parallel" lets both
    # v7x TensorCores share the grid.
    return pl.pallas_call(
        fused_kernel,
        out_shape=out_shape,
        grid_spec=pltpu.PrefetchScalarGridSpec(
            num_scalar_prefetch=0,
            grid=(M // BLOCK_M,),
            in_specs=[
                pl.BlockSpec((C_in, W_out, BLOCK_M), lambda m: (0, 0, m)),
                pl.BlockSpec(memory_space=pltpu.MemorySpace.SMEM),
                pl.BlockSpec(memory_space=pltpu.MemorySpace.SMEM),
            ],
            out_specs=pl.BlockSpec((C_out, W_out, BLOCK_M), lambda m: (0, 0, m)),
        ),
        compiler_params=pltpu.CompilerParams(
            dimension_semantics=("parallel",)),
    )(xr, wt, b)


@jax.jit
def model_forward(x, w, b):
    """x: (N, C_in, H, W) NCHW f32; w: (C_in, C_out, 1, 1); b: (C_out,)."""
    N, C_in, H, W = x.shape
    C_out = w.shape[1]
    H_out, W_out = H - 2, W - 2        # k=1, s=1, p=1 removes a 1-px border
    M = N * H_out                      # fused lane axis of the kernel

    # crop interior + layout: (N, C_in, H_out, W_out) -> (C_in, W_out, N*H_out)
    # (producer may be fused into the pallas_call input via allow_input_fusion)
    xc = x[:, :, 1:H - 1, 1:W - 1]
    xr = jnp.transpose(xc, (1, 3, 0, 2)).reshape(C_in, W_out, M)
    wt = jnp.transpose(w[:, :, 0, 0])              # (C_out, C_in)

    out = _run_fused(xr, wt, b)

    # (C_out, W_out, N*H_out) -> (N, C_out, H_out, W_out)  (NCHW, PyTorch API boundary)
    return jnp.transpose(out.reshape(C_out, W_out, N, H_out), (2, 0, 3, 1))


def reference(x, w, b):
    """Pure-JAX reference of the PyTorch forward (LayerNorm affine is identity)."""
    N, C_in, H, W = x.shape
    xc = x[:, :, 1:H - 1, 1:W - 1]
    v1 = jnp.einsum('nchw,co->nohw', xc, w[:, :, 0, 0]) + b[None, :, None, None]
    mean = jnp.mean(v1, axis=-1, keepdims=True)
    var = jnp.mean((v1 - mean) ** 2, axis=-1, keepdims=True)
    v2 = (v1 - mean) / jnp.sqrt(var + EPS)
    return v2 + v1


if __name__ == "__main__":
    key = jax.random.PRNGKey(0)
    kx, kw, kb = jax.random.split(key, 3)

    # LayerNorm(8) requires conv output width == 8 -> H = W = 10.
    # N = 16 makes the fused lane axis N*H_out exactly 128 (lane-dense stores).
    N, C_in, C_out, H, W = 16, 8, 4, 10, 10
    x = jax.random.normal(kx, (N, C_in, H, W), dtype=jnp.float32)

    # Deterministic ConvTranspose2d(8, 4, 1) params (PyTorch-style uniform fan-in init).
    bound = 1.0 / (C_in ** 0.5)
    w = jax.random.uniform(kw, (C_in, C_out, 1, 1), jnp.float32, -bound, bound)
    b = jax.random.uniform(kb, (C_out,), jnp.float32, -bound, bound)

    out = jax.block_until_ready(model_forward(x, w, b))
    ref = reference(x, w, b)

    assert out.shape == (N, C_out, H - 2, W - 2), out.shape
    err = float(jnp.max(jnp.abs(out - ref)))
    assert jnp.allclose(out, ref, atol=1e-4, rtol=1e-5), err
    print("KERNEL_OK")
</pallas_src>

<mosaic_0001>
module attributes {stable_mosaic.version = 11 : i64} {
  func.func @fused_kernel(%arg0: memref<8x8x128xf32, #tpu.memory_space<vmem>>, %arg1: memref<4x8xf32, #tpu.memory_space<smem>>, %arg2: memref<4xf32, #tpu.memory_space<smem>>, %arg3: memref<4x8x128xf32, #tpu.memory_space<vmem>>) attributes {dimension_semantics = [], scalar_prefetch = 0 : i64, scratch_operands = 0 : i64, tpu.core_type = #tpu.core_type<tc>} {
    %c0 = arith.constant 0 : index
    %c0_0 = arith.constant 0 : index
    %c0_1 = arith.constant 0 : index
    %0 = vector.load %arg0[%c0, %c0_0, %c0_1] : memref<8x8x128xf32, #tpu.memory_space<vmem>>, vector<1x8x128xf32>
    %1 = vector.shape_cast %0 : vector<1x8x128xf32> to vector<8x128xf32>
    %c1 = arith.constant 1 : index
    %c0_2 = arith.constant 0 : index
    %c0_3 = arith.constant 0 : index
    %2 = vector.load %arg0[%c1, %c0_2, %c0_3] : memref<8x8x128xf32, #tpu.memory_space<vmem>>, vector<1x8x128xf32>
    %3 = vector.shape_cast %2 : vector<1x8x128xf32> to vector<8x128xf32>
    %c2 = arith.constant 2 : index
    %c0_4 = arith.constant 0 : index
    %c0_5 = arith.constant 0 : index
    %4 = vector.load %arg0[%c2, %c0_4, %c0_5] : memref<8x8x128xf32, #tpu.memory_space<vmem>>, vector<1x8x128xf32>
    %5 = vector.shape_cast %4 : vector<1x8x128xf32> to vector<8x128xf32>
    %c3 = arith.constant 3 : index
    %c0_6 = arith.constant 0 : index
    %c0_7 = arith.constant 0 : index
    %6 = vector.load %arg0[%c3, %c0_6, %c0_7] : memref<8x8x128xf32, #tpu.memory_space<vmem>>, vector<1x8x128xf32>
    %7 = vector.shape_cast %6 : vector<1x8x128xf32> to vector<8x128xf32>
    %c4 = arith.constant 4 : index
    %c0_8 = arith.constant 0 : index
    %c0_9 = arith.constant 0 : index
    %8 = vector.load %arg0[%c4, %c0_8, %c0_9] : memref<8x8x128xf32, #tpu.memory_space<vmem>>, vector<1x8x128xf32>
    %9 = vector.shape_cast %8 : vector<1x8x128xf32> to vector<8x128xf32>
    %c5 = arith.constant 5 : index
    %c0_10 = arith.constant 0 : index
    %c0_11 = arith.constant 0 : index
    %10 = vector.load %arg0[%c5, %c0_10, %c0_11] : memref<8x8x128xf32, #tpu.memory_space<vmem>>, vector<1x8x128xf32>
    %11 = vector.shape_cast %10 : vector<1x8x128xf32> to vector<8x128xf32>
    %c6 = arith.constant 6 : index
    %c0_12 = arith.constant 0 : index
    %c0_13 = arith.constant 0 : index
    %12 = vector.load %arg0[%c6, %c0_12, %c0_13] : memref<8x8x128xf32, #tpu.memory_space<vmem>>, vector<1x8x128xf32>
    %13 = vector.shape_cast %12 : vector<1x8x128xf32> to vector<8x128xf32>
    %c7 = arith.constant 7 : index
    %c0_14 = arith.constant 0 : index
    %c0_15 = arith.constant 0 : index
    %14 = vector.load %arg0[%c7, %c0_14, %c0_15] : memref<8x8x128xf32, #tpu.memory_space<vmem>>, vector<1x8x128xf32>
    %15 = vector.shape_cast %14 : vector<1x8x128xf32> to vector<8x128xf32>
    %c0_16 = arith.constant 0 : index
    %c0_17 = arith.constant 0 : index
    %16 = memref.load %arg1[%c0_16, %c0_17] : memref<4x8xf32, #tpu.memory_space<smem>>
    %17 = vector.broadcast %16 : f32 to vector<8x128xf32>
    %18 = arith.mulf %1, %17 : vector<8x128xf32>
    %c0_18 = arith.constant 0 : index
    %c1_19 = arith.constant 1 : index
    %19 = memref.load %arg1[%c0_18, %c1_19] : memref<4x8xf32, #tpu.memory_space<smem>>
    %20 = vector.broadcast %19 : f32 to vector<8x128xf32>
    %21 = arith.mulf %3, %20 : vector<8x128xf32>
    %c0_20 = arith.constant 0 : index
    %c2_21 = arith.constant 2 : index
    %22 = memref.load %arg1[%c0_20, %c2_21] : memref<4x8xf32, #tpu.memory_space<smem>>
    %23 = vector.broadcast %22 : f32 to vector<8x128xf32>
    %24 = arith.mulf %5, %23 : vector<8x128xf32>
    %c0_22 = arith.constant 0 : index
    %c3_23 = arith.constant 3 : index
    %25 = memref.load %arg1[%c0_22, %c3_23] : memref<4x8xf32, #tpu.memory_space<smem>>
    %26 = vector.broadcast %25 : f32 to vector<8x128xf32>
    %27 = arith.mulf %7, %26 : vector<8x128xf32>
    %c0_24 = arith.constant 0 : index
    %c4_25 = arith.constant 4 : index
    %28 = memref.load %arg1[%c0_24, %c4_25] : memref<4x8xf32, #tpu.memory_space<smem>>
    %29 = vector.broadcast %28 : f32 to vector<8x128xf32>
    %30 = arith.mulf %9, %29 : vector<8x128xf32>
    %c0_26 = arith.constant 0 : index
    %c5_27 = arith.constant 5 : index
    %31 = memref.load %arg1[%c0_26, %c5_27] : memref<4x8xf32, #tpu.memory_space<smem>>
    %32 = vector.broadcast %31 : f32 to vector<8x128xf32>
    %33 = arith.mulf %11, %32 : vector<8x128xf32>
    %c0_28 = arith.constant 0 : index
    %c6_29 = arith.constant 6 : index
    %34 = memref.load %arg1[%c0_28, %c6_29] : memref<4x8xf32, #tpu.memory_space<smem>>
    %35 = vector.broadcast %34 : f32 to vector<8x128xf32>
    %36 = arith.mulf %13, %35 : vector<8x128xf32>
    %c0_30 = arith.constant 0 : index
    %c7_31 = arith.constant 7 : index
    %37 = memref.load %arg1[%c0_30, %c7_31] : memref<4x8xf32, #tpu.memory_space<smem>>
    %38 = vector.broadcast %37 : f32 to vector<8x128xf32>
    %39 = arith.mulf %15, %38 : vector<8x128xf32>
    %40 = arith.addf %18, %21 : vector<8x128xf32>
    %41 = arith.addf %24, %27 : vector<8x128xf32>
    %42 = arith.addf %30, %33 : vector<8x128xf32>
    %43 = arith.addf %36, %39 : vector<8x128xf32>
    %44 = arith.addf %40, %41 : vector<8x128xf32>
    %45 = arith.addf %42, %43 : vector<8x128xf32>
    %46 = arith.addf %44, %45 : vector<8x128xf32>
    %c0_32 = arith.constant 0 : index
    %47 = memref.load %arg2[%c0_32] : memref<4xf32, #tpu.memory_space<smem>>
    %48 = vector.broadcast %47 : f32 to vector<8x128xf32>
    %49 = arith.addf %46, %48 : vector<8x128xf32>
    %cst = arith.constant dense<0.000000e+00> : vector<128xf32>
    %50 = vector.multi_reduction <add>, %49, %cst [0] : vector<8x128xf32> to vector<128xf32>
    %51 = vector.shape_cast %50 : vector<128xf32> to vector<1x128xf32>
    %cst_33 = arith.constant 8.000000e+00 : f32
    %52 = vector.broadcast %cst_33 : f32 to vector<1x128xf32>
    %53 = arith.divf %51, %52 : vector<1x128xf32>
    %54 = vector.broadcast %53 : vector<1x128xf32> to vector<8x128xf32>
    %55 = arith.subf %49, %54 : vector<8x128xf32>
    %56 = arith.mulf %55, %55 : vector<8x128xf32>
    %cst_34 = arith.constant dense<0.000000e+00> : vector<128xf32>
    %57 = vector.multi_reduction <add>, %56, %cst_34 [0] : vector<8x128xf32> to vector<128xf32>
    %58 = vector.shape_cast %57 : vector<128xf32> to vector<1x128xf32>
    %cst_35 = arith.constant 8.000000e+00 : f32
    %59 = vector.broadcast %cst_35 : f32 to vector<1x128xf32>
    %60 = arith.divf %58, %59 : vector<1x128xf32>
    %cst_36 = arith.constant 9.99999974E-6 : f32
    %61 = vector.broadcast %cst_36 : f32 to vector<1x128xf32>
    %62 = arith.addf %60, %61 : vector<1x128xf32>
    %63 = math.rsqrt %62 : vector<1x128xf32>
    %64 = vector.broadcast %63 : vector<1x128xf32> to vector<8x128xf32>
    %65 = arith.mulf %55, %64 : vector<8x128xf32>
    %66 = arith.addf %65, %49 : vector<8x128xf32>
    %c0_37 = arith.constant 0 : index
    %c0_38 = arith.constant 0 : index
    %c0_39 = arith.constant 0 : index
    %67 = vector.load %arg3[%c0_37, %c0_38, %c0_39] : memref<4x8x128xf32, #tpu.memory_space<vmem>>, vector<1x8x128xf32>
    %68 = vector.shape_cast %67 : vector<1x8x128xf32> to vector<8x128xf32>
    %69 = vector.shape_cast %66 : vector<8x128xf32> to vector<1x8x128xf32>
    tpu.vector_store %arg3[%c0_37, %c0_38, %c0_39], %69 {strides = array<i32>} : memref<4x8x128xf32, #tpu.memory_space<vmem>>, vector<1x8x128xf32>,
    %c1_40 = arith.constant 1 : index
    %c0_41 = arith.constant 0 : index
    %70 = memref.load %arg1[%c1_40, %c0_41] : memref<4x8xf32, #tpu.memory_space<smem>>
    %71 = vector.broadcast %70 : f32 to vector<8x128xf32>
    %72 = arith.mulf %1, %71 : vector<8x128xf32>
    %c1_42 = arith.constant 1 : index
    %c1_43 = arith.constant 1 : index
    %73 = memref.load %arg1[%c1_42, %c1_43] : memref<4x8xf32, #tpu.memory_space<smem>>
    %74 = vector.broadcast %73 : f32 to vector<8x128xf32>
    %75 = arith.mulf %3, %74 : vector<8x128xf32>
    %c1_44 = arith.constant 1 : index
    %c2_45 = arith.constant 2 : index
    %76 = memref.load %arg1[%c1_44, %c2_45] : memref<4x8xf32, #tpu.memory_space<smem>>
    %77 = vector.broadcast %76 : f32 to vector<8x128xf32>
    %78 = arith.mulf %5, %77 : vector<8x128xf32>
    %c1_46 = arith.constant 1 : index
    %c3_47 = arith.constant 3 : index
    %79 = memref.load %arg1[%c1_46, %c3_47] : memref<4x8xf32, #tpu.memory_space<smem>>
    %80 = vector.broadcast %79 : f32 to vector<8x128xf32>
    %81 = arith.mulf %7, %80 : vector<8x128xf32>
    %c1_48 = arith.constant 1 : index
    %c4_49 = arith.constant 4 : index
    %82 = memref.load %arg1[%c1_48, %c4_49] : memref<4x8xf32, #tpu.memory_space<smem>>
    %83 = vector.broadcast %82 : f32 to vector<8x128xf32>
    %84 = arith.mulf %9, %83 : vector<8x128xf32>
    %c1_50 = arith.constant 1 : index
    %c5_51 = arith.constant 5 : index
    %85 = memref.load %arg1[%c1_50, %c5_51] : memref<4x8xf32, #tpu.memory_space<smem>>
    %86 = vector.broadcast %85 : f32 to vector<8x128xf32>
    %87 = arith.mulf %11, %86 : vector<8x128xf32>
    %c1_52 = arith.constant 1 : index
    %c6_53 = arith.constant 6 : index
    %88 = memref.load %arg1[%c1_52, %c6_53] : memref<4x8xf32, #tpu.memory_space<smem>>
    %89 = vector.broadcast %88 : f32 to vector<8x128xf32>
    %90 = arith.mulf %13, %89 : vector<8x128xf32>
    %c1_54 = arith.constant 1 : index
    %c7_55 = arith.constant 7 : index
    %91 = memref.load %arg1[%c1_54, %c7_55] : memref<4x8xf32, #tpu.memory_space<smem>>
    %92 = vector.broadcast %91 : f32 to vector<8x128xf32>
    %93 = arith.mulf %15, %92 : vector<8x128xf32>
    %94 = arith.addf %72, %75 : vector<8x128xf32>
    %95 = arith.addf %78, %81 : vector<8x128xf32>
    %96 = arith.addf %84, %87 : vector<8x128xf32>
    %97 = arith.addf %90, %93 : vector<8x128xf32>
    %98 = arith.addf %94, %95 : vector<8x128xf32>
    %99 = arith.addf %96, %97 : vector<8x128xf32>
    %100 = arith.addf %98, %99 : vector<8x128xf32>
    %c1_56 = arith.constant 1 : index
    %101 = memref.load %arg2[%c1_56] : memref<4xf32, #tpu.memory_space<smem>>
    %102 = vector.broadcast %101 : f32 to vector<8x128xf32>
    %103 = arith.addf %100, %102 : vector<8x128xf32>
    %cst_57 = arith.constant dense<0.000000e+00> : vector<128xf32>
    %104 = vector.multi_reduction <add>, %103, %cst_57 [0] : vector<8x128xf32> to vector<128xf32>
    %105 = vector.shape_cast %104 : vector<128xf32> to vector<1x128xf32>
    %cst_58 = arith.constant 8.000000e+00 : f32
    %106 = vector.broadcast %cst_58 : f32 to vector<1x128xf32>
    %107 = arith.divf %105, %106 : vector<1x128xf32>
    %108 = vector.broadcast %107 : vector<1x128xf32> to vector<8x128xf32>
    %109 = arith.subf %103, %108 : vector<8x128xf32>
    %110 = arith.mulf %109, %109 : vector<8x128xf32>
    %cst_59 = arith.constant dense<0.000000e+00> : vector<128xf32>
    %111 = vector.multi_reduction <add>, %110, %cst_59 [0] : vector<8x128xf32> to vector<128xf32>
    %112 = vector.shape_cast %111 : vector<128xf32> to vector<1x128xf32>
    %cst_60 = arith.constant 8.000000e+00 : f32
    %113 = vector.broadcast %cst_60 : f32 to vector<1x128xf32>
    %114 = arith.divf %112, %113 : vector<1x128xf32>
    %cst_61 = arith.constant 9.99999974E-6 : f32
    %115 = vector.broadcast %cst_61 : f32 to vector<1x128xf32>
    %116 = arith.addf %114, %115 : vector<1x128xf32>
    %117 = math.rsqrt %116 : vector<1x128xf32>
    %118 = vector.broadcast %117 : vector<1x128xf32> to vector<8x128xf32>
    %119 = arith.mulf %109, %118 : vector<8x128xf32>
    %120 = arith.addf %119, %103 : vector<8x128xf32>
    %c1_62 = arith.constant 1 : index
    %c0_63 = arith.constant 0 : index
    %c0_64 = arith.constant 0 : index
    %121 = vector.load %arg3[%c1_62, %c0_63, %c0_64] : memref<4x8x128xf32, #tpu.memory_space<vmem>>, vector<1x8x128xf32>
    %122 = vector.shape_cast %121 : vector<1x8x128xf32> to vector<8x128xf32>
    %123 = vector.shape_cast %120 : vector<8x128xf32> to vector<1x8x128xf32>
    tpu.vector_store %arg3[%c1_62, %c0_63, %c0_64], %123 {strides = array<i32>} : memref<4x8x128xf32, #tpu.memory_space<vmem>>, vector<1x8x128xf32>,
    %c2_65 = arith.constant 2 : index
    %c0_66 = arith.constant 0 : index
    %124 = memref.load %arg1[%c2_65, %c0_66] : memref<4x8xf32, #tpu.memory_space<smem>>
    %125 = vector.broadcast %124 : f32 to vector<8x128xf32>
    %126 = arith.mulf %1, %125 : vector<8x128xf32>
    %c2_67 = arith.constant 2 : index
    %c1_68 = arith.constant 1 : index
    %127 = memref.load %arg1[%c2_67, %c1_68] : memref<4x8xf32, #tpu.memory_space<smem>>
    %128 = vector.broadcast %127 : f32 to vector<8x128xf32>
    %129 = arith.mulf %3, %128 : vector<8x128xf32>
    %c2_69 = arith.constant 2 : index
    %c2_70 = arith.constant 2 : index
    %130 = memref.load %arg1[%c2_69, %c2_70] : memref<4x8xf32, #tpu.memory_space<smem>>
    %131 = vector.broadcast %130 : f32 to vector<8x128xf32>
    %132 = arith.mulf %5, %131 : vector<8x128xf32>
    %c2_71 = arith.constant 2 : index
    %c3_72 = arith.constant 3 : index
    %133 = memref.load %arg1[%c2_71, %c3_72] : memref<4x8xf32, #tpu.memory_space<smem>>
    %134 = vector.broadcast %133 : f32 to vector<8x128xf32>
    %135 = arith.mulf %7, %134 : vector<8x128xf32>
    %c2_73 = arith.constant 2 : index
    %c4_74 = arith.constant 4 : index
    %136 = memref.load %arg1[%c2_73, %c4_74] : memref<4x8xf32, #tpu.memory_space<smem>>
    %137 = vector.broadcast %136 : f32 to vector<8x128xf32>
    %138 = arith.mulf %9, %137 : vector<8x128xf32>
    %c2_75 = arith.constant 2 : index
    %c5_76 = arith.constant 5 : index
    %139 = memref.load %arg1[%c2_75, %c5_76] : memref<4x8xf32, #tpu.memory_space<smem>>
    %140 = vector.broadcast %139 : f32 to vector<8x128xf32>
    %141 = arith.mulf %11, %140 : vector<8x128xf32>
    %c2_77 = arith.constant 2 : index
    %c6_78 = arith.constant 6 : index
    %142 = memref.load %arg1[%c2_77, %c6_78] : memref<4x8xf32, #tpu.memory_space<smem>>
    %143 = vector.broadcast %142 : f32 to vector<8x128xf32>
    %144 = arith.mulf %13, %143 : vector<8x128xf32>
    %c2_79 = arith.constant 2 : index
    %c7_80 = arith.constant 7 : index
    %145 = memref.load %arg1[%c2_79, %c7_80] : memref<4x8xf32, #tpu.memory_space<smem>>
    %146 = vector.broadcast %145 : f32 to vector<8x128xf32>
    %147 = arith.mulf %15, %146 : vector<8x128xf32>
    %148 = arith.addf %126, %129 : vector<8x128xf32>
    %149 = arith.addf %132, %135 : vector<8x128xf32>
    %150 = arith.addf %138, %141 : vector<8x128xf32>
    %151 = arith.addf %144, %147 : vector<8x128xf32>
    %152 = arith.addf %148, %149 : vector<8x128xf32>
    %153 = arith.addf %150, %151 : vector<8x128xf32>
    %154 = arith.addf %152, %153 : vector<8x128xf32>
    %c2_81 = arith.constant 2 : index
    %155 = memref.load %arg2[%c2_81] : memref<4xf32, #tpu.memory_space<smem>>
    %156 = vector.broadcast %155 : f32 to vector<8x128xf32>
    %157 = arith.addf %154, %156 : vector<8x128xf32>
    %cst_82 = arith.constant dense<0.000000e+00> : vector<128xf32>
    %158 = vector.multi_reduction <add>, %157, %cst_82 [0] : vector<8x128xf32> to vector<128xf32>
    %159 = vector.shape_cast %158 : vector<128xf32> to vector<1x128xf32>
    %cst_83 = arith.constant 8.000000e+00 : f32
    %160 = vector.broadcast %cst_83 : f32 to vector<1x128xf32>
    %161 = arith.divf %159, %160 : vector<1x128xf32>
    %162 = vector.broadcast %161 : vector<1x128xf32> to vector<8x128xf32>
    %163 = arith.subf %157, %162 : vector<8x128xf32>
    %164 = arith.mulf %163, %163 : vector<8x128xf32>
    %cst_84 = arith.constant dense<0.000000e+00> : vector<128xf32>
    %165 = vector.multi_reduction <add>, %164, %cst_84 [0] : vector<8x128xf32> to vector<128xf32>
    %166 = vector.shape_cast %165 : vector<128xf32> to vector<1x128xf32>
    %cst_85 = arith.constant 8.000000e+00 : f32
    %167 = vector.broadcast %cst_85 : f32 to vector<1x128xf32>
    %168 = arith.divf %166, %167 : vector<1x128xf32>
    %cst_86 = arith.constant 9.99999974E-6 : f32
    %169 = vector.broadcast %cst_86 : f32 to vector<1x128xf32>
    %170 = arith.addf %168, %169 : vector<1x128xf32>
    %171 = math.rsqrt %170 : vector<1x128xf32>
    %172 = vector.broadcast %171 : vector<1x128xf32> to vector<8x128xf32>
    %173 = arith.mulf %163, %172 : vector<8x128xf32>
    %174 = arith.addf %173, %157 : vector<8x128xf32>
    %c2_87 = arith.constant 2 : index
    %c0_88 = arith.constant 0 : index
    %c0_89 = arith.constant 0 : index
    %175 = vector.load %arg3[%c2_87, %c0_88, %c0_89] : memref<4x8x128xf32, #tpu.memory_space<vmem>>, vector<1x8x128xf32>
    %176 = vector.shape_cast %175 : vector<1x8x128xf32> to vector<8x128xf32>
    %177 = vector.shape_cast %174 : vector<8x128xf32> to vector<1x8x128xf32>
    tpu.vector_store %arg3[%c2_87, %c0_88, %c0_89], %177 {strides = array<i32>} : memref<4x8x128xf32, #tpu.memory_space<vmem>>, vector<1x8x128xf32>,
    %c3_90 = arith.constant 3 : index
    %c0_91 = arith.constant 0 : index
    %178 = memref.load %arg1[%c3_90, %c0_91] : memref<4x8xf32, #tpu.memory_space<smem>>
    %179 = vector.broadcast %178 : f32 to vector<8x128xf32>
    %180 = arith.mulf %1, %179 : vector<8x128xf32>
    %c3_92 = arith.constant 3 : index
    %c1_93 = arith.constant 1 : index
    %181 = memref.load %arg1[%c3_92, %c1_93] : memref<4x8xf32, #tpu.memory_space<smem>>
    %182 = vector.broadcast %181 : f32 to vector<8x128xf32>
    %183 = arith.mulf %3, %182 : vector<8x128xf32>
    %c3_94 = arith.constant 3 : index
    %c2_95 = arith.constant 2 : index
    %184 = memref.load %arg1[%c3_94, %c2_95] : memref<4x8xf32, #tpu.memory_space<smem>>
    %185 = vector.broadcast %184 : f32 to vector<8x128xf32>
    %186 = arith.mulf %5, %185 : vector<8x128xf32>
    %c3_96 = arith.constant 3 : index
    %c3_97 = arith.constant 3 : index
    %187 = memref.load %arg1[%c3_96, %c3_97] : memref<4x8xf32, #tpu.memory_space<smem>>
    %188 = vector.broadcast %187 : f32 to vector<8x128xf32>
    %189 = arith.mulf %7, %188 : vector<8x128xf32>
    %c3_98 = arith.constant 3 : index
    %c4_99 = arith.constant 4 : index
    %190 = memref.load %arg1[%c3_98, %c4_99] : memref<4x8xf32, #tpu.memory_space<smem>>
    %191 = vector.broadcast %190 : f32 to vector<8x128xf32>
    %192 = arith.mulf %9, %191 : vector<8x128xf32>
    %c3_100 = arith.constant 3 : index
    %c5_101 = arith.constant 5 : index
    %193 = memref.load %arg1[%c3_100, %c5_101] : memref<4x8xf32, #tpu.memory_space<smem>>
    %194 = vector.broadcast %193 : f32 to vector<8x128xf32>
    %195 = arith.mulf %11, %194 : vector<8x128xf32>
    %c3_102 = arith.constant 3 : index
    %c6_103 = arith.constant 6 : index
    %196 = memref.load %arg1[%c3_102, %c6_103] : memref<4x8xf32, #tpu.memory_space<smem>>
    %197 = vector.broadcast %196 : f32 to vector<8x128xf32>
    %198 = arith.mulf %13, %197 : vector<8x128xf32>
    %c3_104 = arith.constant 3 : index
    %c7_105 = arith.constant 7 : index
    %199 = memref.load %arg1[%c3_104, %c7_105] : memref<4x8xf32, #tpu.memory_space<smem>>
    %200 = vector.broadcast %199 : f32 to vector<8x128xf32>
    %201 = arith.mulf %15, %200 : vector<8x128xf32>
    %202 = arith.addf %180, %183 : vector<8x128xf32>
    %203 = arith.addf %186, %189 : vector<8x128xf32>
    %204 = arith.addf %192, %195 : vector<8x128xf32>
    %205 = arith.addf %198, %201 : vector<8x128xf32>
    %206 = arith.addf %202, %203 : vector<8x128xf32>
    %207 = arith.addf %204, %205 : vector<8x128xf32>
    %208 = arith.addf %206, %207 : vector<8x128xf32>
    %c3_106 = arith.constant 3 : index
    %209 = memref.load %arg2[%c3_106] : memref<4xf32, #tpu.memory_space<smem>>
    %210 = vector.broadcast %209 : f32 to vector<8x128xf32>
    %211 = arith.addf %208, %210 : vector<8x128xf32>
    %cst_107 = arith.constant dense<0.000000e+00> : vector<128xf32>
    %212 = vector.multi_reduction <add>, %211, %cst_107 [0] : vector<8x128xf32> to vector<128xf32>
    %213 = vector.shape_cast %212 : vector<128xf32> to vector<1x128xf32>
    %cst_108 = arith.constant 8.000000e+00 : f32
    %214 = vector.broadcast %cst_108 : f32 to vector<1x128xf32>
    %215 = arith.divf %213, %214 : vector<1x128xf32>
    %216 = vector.broadcast %215 : vector<1x128xf32> to vector<8x128xf32>
    %217 = arith.subf %211, %216 : vector<8x128xf32>
    %218 = arith.mulf %217, %217 : vector<8x128xf32>
    %cst_109 = arith.constant dense<0.000000e+00> : vector<128xf32>
    %219 = vector.multi_reduction <add>, %218, %cst_109 [0] : vector<8x128xf32> to vector<128xf32>
    %220 = vector.shape_cast %219 : vector<128xf32> to vector<1x128xf32>
    %cst_110 = arith.constant 8.000000e+00 : f32
    %221 = vector.broadcast %cst_110 : f32 to vector<1x128xf32>
    %222 = arith.divf %220, %221 : vector<1x128xf32>
    %cst_111 = arith.constant 9.99999974E-6 : f32
    %223 = vector.broadcast %cst_111 : f32 to vector<1x128xf32>
    %224 = arith.addf %222, %223 : vector<1x128xf32>
    %225 = math.rsqrt %224 : vector<1x128xf32>
    %226 = vector.broadcast %225 : vector<1x128xf32> to vector<8x128xf32>
    %227 = arith.mulf %217, %226 : vector<8x128xf32>
    %228 = arith.addf %227, %211 : vector<8x128xf32>
    %c3_112 = arith.constant 3 : index
    %c0_113 = arith.constant 0 : index
    %c0_114 = arith.constant 0 : index
    %229 = vector.load %arg3[%c3_112, %c0_113, %c0_114] : memref<4x8x128xf32, #tpu.memory_space<vmem>>, vector<1x8x128xf32>
    %230 = vector.shape_cast %229 : vector<1x8x128xf32> to vector<8x128xf32>
    %231 = vector.shape_cast %228 : vector<8x128xf32> to vector<1x8x128xf32>
    tpu.vector_store %arg3[%c3_112, %c0_113, %c0_114], %231 {strides = array<i32>} : memref<4x8x128xf32, #tpu.memory_space<vmem>>, vector<1x8x128xf32>,
    return
  }
}

</mosaic_0001>

<llo_original>
// kernel: model_forward.1
$region0: #{model_forward.1}
  #allocation0 [shape = 'u32[]', space=smem, size = 0x4, offset = 0x4, fixed_abs, tag = 'smem constant byte address 0x4 - core index']
  #allocation1 [shape = 'u32[144,128]{1,0:T(1,128)}', space=vmem, size = 0x12000, scoped, tag = 'internal scratch']
  %s0 = inlined_call_operand.vmem [shape: f32[8,8,128], index: 0, kind: input, shape index: {}]
  %s1 = inlined_call_operand.vmem [shape: f32[4,8], index: 1, kind: input, shape index: {}]
  %s2 = inlined_call_operand.vmem [shape: f32[4], index: 2, kind: input, shape index: {}]
  %s3 = inlined_call_operand.vmem [shape: f32[4,8,128], index: 3, kind: output, shape index: {}]
  %s4 = sld [smem:[#allocation0]]
  $region30: #{model_forward.1} parent=0
    _
  %s6 = ssub.s32 1, %s4
  %s7 = scalar_select 0, %s6, %s4
  $region1: #{model_forward.1} parent=0
    #allocation2 [shape = 'u8[2048]{0}', space=smem, size = 0x800, scoped, tag = 'input window, operand 1, single buffered']
    #allocation3 [shape = 's32[1]{0}', space=sflag, size = 0x4, scoped, tag = 'scoped memory for model_forward.1']
    #allocation4 [shape = 'u8[512]{0}', space=smem, size = 0x200, scoped, tag = 'input window, operand 2, single buffered']
    #allocation5 [shape = 's32[1]{0}', space=sflag, size = 0x4, scoped, tag = 'scoped memory for model_forward.1']
    %8 = vsyncpa [#allocation3], 0
    %9 = vsyncpa [#allocation5], 0
    // Predicated region
    $region2: #{model_forward.1} parent=1 // pred_check
      _
    $region3: #{model_forward.1} parent=1 // pred_check_branch
      %11 = sbr.rel (0) target = $region5
    $region4: #{model_forward.1} parent=1 // pred_region
      _
    $region5: #{model_forward.1} parent=1 // pred_fallthru
      _
    // Predicated region
    $region6: #{model_forward.1} parent=1 // pred_check
      _
    $region7: #{model_forward.1} parent=1 // pred_check_branch
      %13 = sbr.rel (0) target = $region9
    $region8: #{model_forward.1} parent=1 // pred_region
      %s15 = ssub.s32 64, 64
      %16 = vsyncadd [#allocation3], %s15
      %s18 = sshll.u32 %s1, 4
      %s19 = int_to_ptr.vmem [resolvable:$true] %s18
      %21 = dma.vmem_to_smem %s19, 64, [#allocation2], [#allocation3]
    $region9: #{model_forward.1} parent=1 // pred_fallthru
      _
    // Predicated region
    $region10: #{model_forward.1} parent=1 // pred_check
      _
    $region11: #{model_forward.1} parent=1 // pred_check_branch
      %23 = sbr.rel (0) target = $region13
    $region12: #{model_forward.1} parent=1 // pred_region
      %s25 = ssub.s32 16, 16
      %26 = vsyncadd [#allocation5], %s25
      %s28 = sshll.u32 %s2, 4
      %s29 = int_to_ptr.vmem [resolvable:$true] %s28
      %31 = dma.vmem_to_smem %s29, 16, [#allocation4], [#allocation5]
    $region13: #{model_forward.1} parent=1 // pred_fallthru
      _
    // Predicated region
    $region14: #{model_forward.1} parent=1 // pred_check
      _
    $region15: #{model_forward.1} parent=1 // pred_check_branch
      %33 = sbr.rel (0) target = $region17
    $region16: #{model_forward.1} parent=1 // pred_region
      %34 = dma.done [#allocation3], 64
    $region17: #{model_forward.1} parent=1 // pred_fallthru
      _
    // Predicated region
    $region18: #{model_forward.1} parent=1 // pred_check
      _
    $region19: #{model_forward.1} parent=1 // pred_check_branch
      %36 = sbr.rel (0) target = $region21
    $region20: #{model_forward.1} parent=1 // pred_region
      %37 = dma.done [#allocation5], 16
    $region21: #{model_forward.1} parent=1 // pred_fallthru
      _
    %38 = sfence
    %v39 = vld [vmem:[%s0] sm:$0xff]
    %s40 = scalar_lea.vmem %s0, 8
    %v41 = vld [vmem:[%s40] sm:$0xff]
    %s42 = scalar_lea.vmem %s0, 16
    %v43 = vld [vmem:[%s42] sm:$0xff]
    %s44 = scalar_lea.vmem %s0, 24
    %v45 = vld [vmem:[%s44] sm:$0xff]
    %s46 = scalar_lea.vmem %s0, 32
    %v47 = vld [vmem:[%s46] sm:$0xff]
    %s48 = scalar_lea.vmem %s0, 40
    %v49 = vld [vmem:[%s48] sm:$0xff]
    %s50 = scalar_lea.vmem %s0, 48
    %v51 = vld [vmem:[%s50] sm:$0xff]
    %s52 = scalar_lea.vmem %s0, 56
    %v53 = vld [vmem:[%s52] sm:$0xff]
    %s54 = sld [smem:[#allocation2]]
    %v55 = vstv %s54
    %v56 = vmul.f32 %v39, %v55
    %s57 = sld [smem:[#allocation2 + $0x1]]
    %v58 = vstv %s57
    %v59 = vmul.f32 %v41, %v58
    %s60 = sld [smem:[#allocation2 + $0x2]]
    %v61 = vstv %s60
    %v62 = vmul.f32 %v43, %v61
    %s63 = sld [smem:[#allocation2 + $0x3]]
    %v64 = vstv %s63
    %v65 = vmul.f32 %v45, %v64
    %s66 = sld [smem:[#allocation2 + $0x4]]
    %v67 = vstv %s66
    %v68 = vmul.f32 %v47, %v67
    %s69 = sld [smem:[#allocation2 + $0x5]]
    %v70 = vstv %s69
    %v71 = vmul.f32 %v49, %v70
    %s72 = sld [smem:[#allocation2 + $0x6]]
    %v73 = vstv %s72
    %v74 = vmul.f32 %v51, %v73
    %s75 = sld [smem:[#allocation2 + $0x7]]
    %v76 = vstv %s75
    %v77 = vmul.f32 %v53, %v76
    %v78 = vadd.f32 %v56, %v59
    %v79 = vadd.f32 %v62, %v65
    %v80 = vadd.f32 %v68, %v71
    %v81 = vadd.f32 %v74, %v77
    %v82 = vadd.f32 %v78, %v79
    %v83 = vadd.f32 %v80, %v81
    %v84 = vadd.f32 %v82, %v83
    %s85 = sld [smem:[#allocation4]]
    %v86 = vstv %s85
    %v87 = vadd.f32 %v84, %v86
    %v88 = vrot.slane %v87, 4
    %v89 = vadd.f32 %v87, %v88
    %v90 = vrot.slane %v89, 2
    %v91 = vadd.f32 %v89, %v90
    %v92 = vrot.slane %v91, 1
    %v93 = vadd.f32 %v91, %v92
    %v94 = vrcp.pop 8.0
    %v95 = vmul.f32 %v93, %v94
    %v96 = vsub.f32 %v87, %v95
    %v97 = vmul.f32 %v96, %v96
    %v98 = vrot.slane %v97, 4
    %v99 = vadd.f32 %v97, %v98
    %v100 = vrot.slane %v99, 2
    %v101 = vadd.f32 %v99, %v100
    %v102 = vrot.slane %v101, 1
    %v103 = vadd.f32 %v101, %v102
    %v104 = vmul.f32 %v103, %v94
    %v105 = vadd.f32 %v104, 1e-05
    %v106 = vrsqrt.pop %v105
    %v107 = vmul.f32 %v96, %v106
    %v108 = vadd.f32 %v107, %v87
    %109 = vst [vmem:[%s3] sm:$0xff] %v108
    %s110 = sld [smem:[#allocation2 + $0x80]]
    %v111 = vstv %s110
    %v112 = vmul.f32 %v39, %v111
    %s113 = sld [smem:[#allocation2 + $0x81]]
    %v114 = vstv %s113
    %v115 = vmul.f32 %v41, %v114
    %s116 = sld [smem:[#allocation2 + $0x82]]
    %v117 = vstv %s116
    %v118 = vmul.f32 %v43, %v117
    %s119 = sld [smem:[#allocation2 + $0x83]]
    %v120 = vstv %s119
    %v121 = vmul.f32 %v45, %v120
    %s122 = sld [smem:[#allocation2 + $0x84]]
    %v123 = vstv %s122
    %v124 = vmul.f32 %v47, %v123
    %s125 = sld [smem:[#allocation2 + $0x85]]
    %v126 = vstv %s125
    %v127 = vmul.f32 %v49, %v126
    %s128 = sld [smem:[#allocation2 + $0x86]]
    %v129 = vstv %s128
    %v130 = vmul.f32 %v51, %v129
    %s131 = sld [smem:[#allocation2 + $0x87]]
    %v132 = vstv %s131
    %v133 = vmul.f32 %v53, %v132
    %v134 = vadd.f32 %v112, %v115
    %v135 = vadd.f32 %v118, %v121
    %v136 = vadd.f32 %v124, %v127
    %v137 = vadd.f32 %v130, %v133
    %v138 = vadd.f32 %v134, %v135
    %v139 = vadd.f32 %v136, %v137
    %v140 = vadd.f32 %v138, %v139
    %s141 = sld [smem:[#allocation4 + $0x1]]
    %v142 = vstv %s141
    %v143 = vadd.f32 %v140, %v142
    %v144 = vrot.slane %v143, 4
    %v145 = vadd.f32 %v143, %v144
    %v146 = vrot.slane %v145, 2
    %v147 = vadd.f32 %v145, %v146
    %v148 = vrot.slane %v147, 1
    %v149 = vadd.f32 %v147, %v148
    %v150 = vmul.f32 %v149, %v94
    %v151 = vsub.f32 %v143, %v150
    %v152 = vmul.f32 %v151, %v151
    %v153 = vrot.slane %v152, 4
    %v154 = vadd.f32 %v152, %v153
    %v155 = vrot.slane %v154, 2
    %v156 = vadd.f32 %v154, %v155
    %v157 = vrot.slane %v156, 1
    %v158 = vadd.f32 %v156, %v157
    %v159 = vmul.f32 %v158, %v94
    %v160 = vadd.f32 %v159, 1e-05
    %v161 = vrsqrt.pop %v160
    %v162 = vmul.f32 %v151, %v161
    %v163 = vadd.f32 %v162, %v143
    %s164 = scalar_lea.vmem %s3, 8
    %165 = vst [vmem:[%s164] sm:$0xff] %v163
    %s166 = sld [smem:[#allocation2 + $0x100]]
    %v167 = vstv %s166
    %v168 = vmul.f32 %v39, %v167
    %s169 = sld [smem:[#allocation2 + $0x101]]
    %v170 = vstv %s169
    %v171 = vmul.f32 %v41, %v170
    %s172 = sld [smem:[#allocation2 + $0x102]]
    %v173 = vstv %s172
    %v174 = vmul.f32 %v43, %v173
    %s175 = sld [smem:[#allocation2 + $0x103]]
    %v176 = vstv %s175
    %v177 = vmul.f32 %v45, %v176
    %s178 = sld [smem:[#allocation2 + $0x104]]
    %v179 = vstv %s178
    %v180 = vmul.f32 %v47, %v179
    %s181 = sld [smem:[#allocation2 + $0x105]]
    %v182 = vstv %s181
    %v183 = vmul.f32 %v49, %v182
    %s184 = sld [smem:[#allocation2 + $0x106]]
    %v185 = vstv %s184
    %v186 = vmul.f32 %v51, %v185
    %s187 = sld [smem:[#allocation2 + $0x107]]
    %v188 = vstv %s187
    %v189 = vmul.f32 %v53, %v188
    %v190 = vadd.f32 %v168, %v171
    %v191 = vadd.f32 %v174, %v177
    %v192 = vadd.f32 %v180, %v183
    %v193 = vadd.f32 %v186, %v189
    %v194 = vadd.f32 %v190, %v191
    %v195 = vadd.f32 %v192, %v193
    %v196 = vadd.f32 %v194, %v195
    %s197 = sld [smem:[#allocation4 + $0x2]]
    %v198 = vstv %s197
    %v199 = vadd.f32 %v196, %v198
    %v200 = vrot.slane %v199, 4
    %v201 = vadd.f32 %v199, %v200
    %v202 = vrot.slane %v201, 2
    %v203 = vadd.f32 %v201, %v202
    %v204 = vrot.slane %v203, 1
    %v205 = vadd.f32 %v203, %v204
    %v206 = vmul.f32 %v205, %v94
    %v207 = vsub.f32 %v199, %v206
    %v208 = vmul.f32 %v207, %v207
    %v209 = vrot.slane %v208, 4
    %v210 = vadd.f32 %v208, %v209
    %v211 = vrot.slane %v210, 2
    %v212 = vadd.f32 %v210, %v211
    %v213 = vrot.slane %v212, 1
    %v214 = vadd.f32 %v212, %v213
    %v215 = vmul.f32 %v214, %v94
    %v216 = vadd.f32 %v215, 1e-05
    %v217 = vrsqrt.pop %v216
    %v218 = vmul.f32 %v207, %v217
    %v219 = vadd.f32 %v218, %v199
    %s220 = scalar_lea.vmem %s3, 16
    %221 = vst [vmem:[%s220] sm:$0xff] %v219
    %s222 = sld [smem:[#allocation2 + $0x180]]
    %v223 = vstv %s222
    %v224 = vmul.f32 %v39, %v223
    %s225 = sld [smem:[#allocation2 + $0x181]]
    %v226 = vstv %s225
    %v227 = vmul.f32 %v41, %v226
    %s228 = sld [smem:[#allocation2 + $0x182]]
    %v229 = vstv %s228
    %v230 = vmul.f32 %v43, %v229
    %s231 = sld [smem:[#allocation2 + $0x183]]
    %v232 = vstv %s231
    %v233 = vmul.f32 %v45, %v232
    %s234 = sld [smem:[#allocation2 + $0x184]]
    %v235 = vstv %s234
    %v236 = vmul.f32 %v47, %v235
    %s237 = sld [smem:[#allocation2 + $0x185]]
    %v238 = vstv %s237
    %v239 = vmul.f32 %v49, %v238
    %s240 = sld [smem:[#allocation2 + $0x186]]
    %v241 = vstv %s240
    %v242 = vmul.f32 %v51, %v241
    %s243 = sld [smem:[#allocation2 + $0x187]]
    %v244 = vstv %s243
    %v245 = vmul.f32 %v53, %v244
    %v246 = vadd.f32 %v224, %v227
    %v247 = vadd.f32 %v230, %v233
    %v248 = vadd.f32 %v236, %v239
    %v249 = vadd.f32 %v242, %v245
    %v250 = vadd.f32 %v246, %v247
    %v251 = vadd.f32 %v248, %v249
    %v252 = vadd.f32 %v250, %v251
    %s253 = sld [smem:[#allocation4 + $0x3]]
    %v254 = vstv %s253
    %v255 = vadd.f32 %v252, %v254
    %v256 = vrot.slane %v255, 4
    %v257 = vadd.f32 %v255, %v256
    %v258 = vrot.slane %v257, 2
    %v259 = vadd.f32 %v257, %v258
    %v260 = vrot.slane %v259, 1
    %v261 = vadd.f32 %v259, %v260
    %v262 = vmul.f32 %v261, %v94
    %v263 = vsub.f32 %v255, %v262
    %v264 = vmul.f32 %v263, %v263
    %v265 = vrot.slane %v264, 4
    %v266 = vadd.f32 %v264, %v265
    %v267 = vrot.slane %v266, 2
    %v268 = vadd.f32 %v266, %v267
    %v269 = vrot.slane %v268, 1
    %v270 = vadd.f32 %v268, %v269
    %v271 = vmul.f32 %v270, %v94
    %v272 = vadd.f32 %v271, 1e-05
    %v273 = vrsqrt.pop %v272
    %v274 = vmul.f32 %v263, %v273
    %v275 = vadd.f32 %v274, %v255
    %s276 = scalar_lea.vmem %s3, 24
    %277 = vst [vmem:[%s276] sm:$0xff] %v275
    // Predicated region
    $region22: #{model_forward.1} parent=1 // pred_check
      _
    $region23: #{model_forward.1} parent=1 // pred_check_branch
      %279 = sbr.rel (0) target = $region25
    $region24: #{model_forward.1} parent=1 // pred_region
      _
    $region25: #{model_forward.1} parent=1 // pred_fallthru
      _
    // Predicated region
    $region26: #{model_forward.1} parent=1 // pred_check
      _
    $region27: #{model_forward.1} parent=1 // pred_check_branch
      %281 = sbr.rel (0) target = $region29
    $region28: #{model_forward.1} parent=1 // pred_region
      _
    $region29: #{model_forward.1} parent=1 // pred_fallthru
      _
    %282 = vsyncpa [#allocation3], 1
    %283 = vsyncpa [#allocation5], 1

</llo_original>
